<compile_context>
chip_gen: v7x
topology: tpu7x:2x2x1
jax: 0.10.0
libtpu: 0.0.40
codegen_flags: <defaults>
</compile_context>

<pallas_src>
import functools

import jax
import jax.numpy as jnp
from jax.experimental import pallas as pl
from jax.experimental.pallas import tpu as pltpu


# ----------------------------- kernel helpers -----------------------------


def _chunk_contribs(sl, col0, l_true, masked):
    """Per-chunk contributions for (min, max, sum); identity values where masked."""
    if not masked:
        return sl, sl, sl.astype(jnp.float32)
    iota = jax.lax.broadcasted_iota(jnp.int32, sl.shape, dimension=1)
    valid = (col0 + iota) < l_true
    pos = jnp.array(jnp.inf, dtype=sl.dtype)
    neg = jnp.array(-jnp.inf, dtype=sl.dtype)
    mn_c = jnp.where(valid, sl, pos)
    mx_c = jnp.where(valid, sl, neg)
    sm_c = jnp.where(valid, sl.astype(jnp.float32), jnp.float32(0.0))
    return mn_c, mx_c, sm_c


def _fold(x_ref, l_idx, *, n_chunks, chunk, tl, masked, l_true):
    """VPU fold of 128-lane chunks into (TR, chunk) partials.

    Chunks are sliced directly off the Ref (static slices -> no extra copy);
    only the three partials + one chunk are live, bounding vreg pressure.
    Padded columns can only live in the statically-last chunk.
    """
    mn_p = mx_p = sm_p = None
    for k in range(n_chunks):                      # static, unrolled
        sl = x_ref[:, k * chunk:(k + 1) * chunk]   # free 128-aligned ref slice
        is_last_chunk = masked and (k == n_chunks - 1)
        col0 = l_idx * tl + k * chunk
        mn_c, mx_c, sm_c = _chunk_contribs(sl, col0, l_true, is_last_chunk)
        if k == 0:
            mn_p, mx_p, sm_p = mn_c, mx_c, sm_c
        else:
            mn_p = jnp.minimum(mn_p, mn_c)
            mx_p = jnp.maximum(mx_p, mx_c)
            sm_p = sm_p + sm_c
    return mn_p, mx_p, sm_p


def _finalize(out_ref, mn_p, mx_p, sm_p, inv_len):
    """Single cross-lane (XLU) reduce per statistic; one fused (TR, 3) store."""
    mn = jnp.min(mn_p.astype(jnp.float32), axis=-1, keepdims=True)
    mx = jnp.max(mx_p.astype(jnp.float32), axis=-1, keepdims=True)
    avg = jnp.sum(sm_p, axis=-1, keepdims=True) * inv_len
    out_ref[...] = jnp.concatenate([mn, avg, mx], axis=-1).astype(out_ref.dtype)


# ------------------------------ kernel bodies ------------------------------


def _gp_kernel_single(x_ref, out_ref, *, n_chunks, chunk, tl, inv_len,
                      masked, l_true):
    """Whole row fits in one L tile: no scratch, no cross-tile accumulation."""
    mn_p, mx_p, sm_p = _fold(x_ref, 0, n_chunks=n_chunks, chunk=chunk, tl=tl,
                             masked=masked, l_true=l_true)
    _finalize(out_ref, mn_p, mx_p, sm_p, inv_len)


def _gp_kernel_multi(x_ref, out_ref, mn_acc, mx_acc, sm_acc, *,
                     n_chunks, chunk, tl, inv_len, masked, l_true):
    """L split across >= 2 tiles: f32 sum / dtype min-max scratch across tiles."""
    l = pl.program_id(1)
    n_l = pl.num_programs(1)

    mn_p, mx_p, sm_p = _fold(x_ref, l, n_chunks=n_chunks, chunk=chunk, tl=tl,
                             masked=masked, l_true=l_true)

    @pl.when(l == 0)
    def _():
        mn_acc[...] = mn_p
        mx_acc[...] = mx_p
        sm_acc[...] = sm_p

    @pl.when(jnp.logical_and(l > 0, l < n_l - 1))
    def _():
        mn_acc[...] = jnp.minimum(mn_acc[...], mn_p)
        mx_acc[...] = jnp.maximum(mx_acc[...], mx_p)
        sm_acc[...] = sm_acc[...] + sm_p

    @pl.when(l == n_l - 1)  # n_l >= 2 on this path, so disjoint from l == 0
    def _():
        # Fuse the last tile's in-vreg partials with the scratch directly in
        # the finalize (no store-then-reload of the scratch on the last step).
        mn_f = jnp.minimum(mn_acc[...], mn_p)
        mx_f = jnp.maximum(mx_acc[...], mx_p)
        sm_f = sm_acc[...] + sm_p
        _finalize(out_ref, mn_f, mx_f, sm_f, inv_len)


# -------------------------------- wrapper ----------------------------------


def _pick_tile(full, align, target):
    """Largest multiple of `align` <= target that evenly divides `full`; else `full`.

    `full` itself is always a legal block extent for that axis (block == full dim).
    """
    if full % align != 0:
        return full
    target = max(align, min(full, target))
    t = target - (target % align)
    while t >= align:
        if full % t == 0:
            return t
        t -= align
    return full


def global_pooling(x, *, max_tile_bytes=4 * 1024 * 1024):
    """x: (B, C, L) float array -> (B, 3*C) = concat([min, mean, max], dim=-1).

    # TODO(synk): only the module-default dim=-1 is implemented; a non-default
    # `dim` would need a moveaxis + different output packing in the wrapper.
    """
    B, C, L = x.shape
    R = B * C
    dtype = x.dtype
    itemsize = jnp.dtype(dtype).itemsize

    xf = x.reshape(R, L)                            # free contiguous reshape

    # --- row tile: keep partials in vregs, give the 'parallel' axis >=2 steps ---
    sub = 8 * max(1, 4 // itemsize)                 # sublane align: 8 f32 / 16 bf16
    target_rows = 64 if itemsize >= 4 else 128      # vreg-pressure cap (perf review)
    if R >= 2 * sub:
        target_rows = min(target_rows, R // 2)      # >=2 row steps -> both v7x TCs
    TR = _pick_tile(R, sub, target_rows)

    # --- L tile: prefer TL = L; otherwise the largest 128-multiple divisor ---
    target_lanes = max(128, (max_tile_bytes // (TR * itemsize)) // 128 * 128)
    L_true = L
    masked = False
    if L % 128 != 0 and TR * L * itemsize > max_tile_bytes:
        # Long unaligned L: pad to a lane multiple and mask the tail in-kernel.
        L_pad = ((L + 127) // 128) * 128
        xf = jnp.pad(xf, ((0, 0), (0, L_pad - L)))
        L = L_pad
        masked = True
    TL = _pick_tile(L, 128, target_lanes)

    chunk = 128 if TL % 128 == 0 else TL
    n_chunks = TL // chunk
    n_rows = R // TR
    n_l = L // TL
    inv_len = 1.0 / float(L_true)

    out_shape = jax.ShapeDtypeStruct((R, 3), dtype)
    cparams = pltpu.CompilerParams(
        dimension_semantics=("parallel",) if n_l == 1 else ("parallel", "arbitrary"),
        vmem_limit_bytes=32 * 1024 * 1024,
    )

    if n_l == 1:
        kernel = functools.partial(
            _gp_kernel_single, n_chunks=n_chunks, chunk=chunk, tl=TL,
            inv_len=inv_len, masked=masked, l_true=L_true)
        out = pl.pallas_call(
            kernel,
            out_shape=out_shape,
            grid_spec=pltpu.PrefetchScalarGridSpec(
                num_scalar_prefetch=0,
                grid=(n_rows,),
                in_specs=[pl.BlockSpec((TR, TL), lambda i: (i, 0))],
                out_specs=pl.BlockSpec((TR, 3), lambda i: (i, 0)),
            ),
            compiler_params=cparams,
        )(xf)
    else:
        kernel = functools.partial(
            _gp_kernel_multi, n_chunks=n_chunks, chunk=chunk, tl=TL,
            inv_len=inv_len, masked=masked, l_true=L_true)
        out = pl.pallas_call(
            kernel,
            out_shape=out_shape,
            grid_spec=pltpu.PrefetchScalarGridSpec(
                num_scalar_prefetch=0,
                grid=(n_rows, n_l),
                in_specs=[pl.BlockSpec((TR, TL), lambda i, l: (i, l))],
                out_specs=pl.BlockSpec((TR, 3), lambda i, l: (i, 0)),
                scratch_shapes=[pltpu.VMEM((TR, chunk), dtype),        # min
                                pltpu.VMEM((TR, chunk), dtype),        # max
                                pltpu.VMEM((TR, chunk), jnp.float32)], # sum
            ),
            compiler_params=cparams,
        )(xf)

    # (R, 3) -> (B, C, 3) -> (B, 3, C) -> (B, 3*C)  == torch.cat([min, avg, max], -1)
    return out.reshape(B, C, 3).transpose(0, 2, 1).reshape(B, 3 * C)


# ------------------------------- reference ---------------------------------


def _reference(x):
    mn = jnp.min(x, axis=-1)
    mx = jnp.max(x, axis=-1)
    avg = jnp.mean(x, axis=-1)
    return jnp.concatenate([mn, avg, mx], axis=-1)


if __name__ == "__main__":
    key = jax.random.PRNGKey(0)

    # 1) Small shape consistent with the module (B, C, L) -- single-tile path.
    B, C, L = 2, 4, 16
    x = jax.random.normal(key, (B, C, L), dtype=jnp.float32)
    out = jax.block_until_ready(global_pooling(x))
    ref = _reference(x)
    assert out.shape == (B, 3 * C), out.shape
    assert jnp.allclose(out, ref, atol=1e-5, rtol=1e-5)

    # 2) Forced multi-L-tile path (small budget) -- exercises scratch + fused finalize.
    k2 = jax.random.PRNGKey(0)
    B2, C2, L2 = 2, 64, 2048
    x2 = jax.random.normal(k2, (B2, C2, L2), dtype=jnp.float32)
    out2 = jax.block_until_ready(global_pooling(x2, max_tile_bytes=128 * 1024))
    ref2 = _reference(x2)
    assert out2.shape == (B2, 3 * C2), out2.shape
    assert jnp.allclose(out2, ref2, atol=1e-4, rtol=1e-4)

    # 3) Unaligned L forced through the padded+masked multi-tile path.
    k3 = jax.random.PRNGKey(0)
    B3, C3, L3 = 2, 8, 200
    x3 = jax.random.normal(k3, (B3, C3, L3), dtype=jnp.float32)
    out3 = jax.block_until_ready(global_pooling(x3, max_tile_bytes=4096))
    ref3 = _reference(x3)
    assert out3.shape == (B3, 3 * C3), out3.shape
    assert jnp.allclose(out3, ref3, atol=1e-5, rtol=1e-5)

    print("KERNEL_OK")
</pallas_src>

<mosaic_0001>
module attributes {stable_mosaic.version = 11 : i64} {
  func.func @_gp_kernel_single(%arg0: i32, %arg1: memref<8x16xf32, #tpu.memory_space<vmem>>, %arg2: memref<8x3xf32, #tpu.memory_space<vmem>>) attributes {dimension_semantics = [#tpu.dimension_semantics<parallel>], iteration_bounds = array<i64: 1>, scalar_prefetch = 0 : i64, scratch_operands = 0 : i64, tpu.core_type = #tpu.core_type<tc>, window_params = [{transform_indices = @transform_0, window_bounds = array<i64: 8, 16>}, {transform_indices = @transform_1, window_bounds = array<i64: 8, 3>}]} {
    %c0 = arith.constant 0 : index
    %c0_0 = arith.constant 0 : index
    %0 = vector.load %arg1[%c0, %c0_0] : memref<8x16xf32, #tpu.memory_space<vmem>>, vector<8x16xf32>
    %cst = arith.constant dense<0x7F800000> : vector<8xf32>
    %1 = vector.multi_reduction <minimumf>, %0, %cst [1] : vector<8x16xf32> to vector<8xf32>
    %2 = vector.shape_cast %1 : vector<8xf32> to vector<8x1xf32>
    %cst_1 = arith.constant dense<0xFF800000> : vector<8xf32>
    %3 = vector.multi_reduction <maximumf>, %0, %cst_1 [1] : vector<8x16xf32> to vector<8xf32>
    %4 = vector.shape_cast %3 : vector<8xf32> to vector<8x1xf32>
    %cst_2 = arith.constant dense<0.000000e+00> : vector<8xf32>
    %5 = vector.multi_reduction <add>, %0, %cst_2 [1] : vector<8x16xf32> to vector<8xf32>
    %6 = vector.shape_cast %5 : vector<8xf32> to vector<8x1xf32>
    %cst_3 = arith.constant 6.250000e-02 : f32
    %7 = vector.broadcast %cst_3 : f32 to vector<8x1xf32>
    %8 = arith.mulf %6, %7 : vector<8x1xf32>
    %9 = tpu.concatenate %2, %8, %4 in 1 : vector<8x1xf32>, vector<8x1xf32>, vector<8x1xf32> -> vector<8x3xf32>
    %c0_4 = arith.constant 0 : index
    %c0_5 = arith.constant 0 : index
    %10 = vector.load %arg2[%c0_4, %c0_5] : memref<8x3xf32, #tpu.memory_space<vmem>>, vector<8x3xf32>
    tpu.vector_store %arg2[%c0_4, %c0_5], %9 {strides = array<i32>} : memref<8x3xf32, #tpu.memory_space<vmem>>, vector<8x3xf32>,
    return
  }
  func.func @transform_0(%arg0: i32) -> (i32, i32) {
    %c0_i32 = arith.constant 0 : i32
    %c0_i32_0 = arith.constant 0 : i32
    return %arg0, %c0_i32 : i32, i32
  }
  func.func @transform_1(%arg0: i32) -> (i32, i32) {
    %c0_i32 = arith.constant 0 : i32
    %c0_i32_0 = arith.constant 0 : i32
    return %arg0, %c0_i32 : i32, i32
  }
}

</mosaic_0001>

<llo_original>
// kernel: tpu_custom_call.1
$region0: #{tpu_custom_call.1}
  #allocation0 [shape = 'u32[]', space=smem, size = 0x4, offset = 0x4, fixed_abs, tag = 'smem constant byte address 0x4 - core index']
  #allocation1 [shape = 'u32[144,128]{1,0:T(1,128)}', space=vmem, size = 0x12000, scoped, tag = 'internal scratch']
  %s0 = inlined_call_operand.hbm [shape: f32[8,16], index: 0, kind: input, shape index: {}]
  %s1 = inlined_call_operand.vmem [shape: f32[8,3], index: 1, kind: output, shape index: {}]
  %s2 = sld [smem:[#allocation0]]
  $region18: #{tpu_custom_call.1} parent=0
    _
  %s4 = ssub.s32 1, %s2
  %s5 = scalar_select 0, %s4, %s2
  $region1: #{tpu_custom_call.1} parent=0
    #allocation2 [shape = 'u8[4096]{0}', space=vmem, size = 0x1000, scoped, tag = 'input window, operand 0, single buffered']
    #allocation3 [shape = 's32[1]{0}', space=sflag, size = 0x4, scoped, tag = 'scoped memory for tpu_custom_call.1']
    %6 = vsyncpa [#allocation3], 0
    // Predicated region
    $region2: #{tpu_custom_call.1} parent=1 // pred_check
      _
    $region3: #{tpu_custom_call.1} parent=1 // pred_check_branch
      %8 = sbr.rel (0) target = $region5
    $region4: #{tpu_custom_call.1} parent=1 // pred_region
      %s10 = ssub.s32 128, 128
      %11 = vsyncadd [#allocation3], %s10
      %s13 = sshll.u32 [#allocation2], 4
      %s14 = int_to_ptr.vmem [resolvable:$true] %s13
      %16 = dma.hbm_to_vmem [thread:$0]  %s0, 128, %s14, [#allocation3]
    $region5: #{tpu_custom_call.1} parent=1 // pred_fallthru
      _
    // Predicated region
    $region6: #{tpu_custom_call.1} parent=1 // pred_check
      _
    $region7: #{tpu_custom_call.1} parent=1 // pred_check_branch
      %18 = sbr.rel (0) target = $region9
    $region8: #{tpu_custom_call.1} parent=1 // pred_region
      %19 = dma.done [#allocation3], 128
    $region9: #{tpu_custom_call.1} parent=1 // pred_fallthru
      _
    %v20 = vld [vmem:[#allocation2] sm:$0xff]
    %vm21 = vcmask 130048
    %v22 = vsel %vm21, %v20, inf
    %23 = vmin.xlane.f32.xlu0 %v22
    %v24 = vpop.xlane.xlu0 %23
    %v25 = vsel %vm21, %v20, -inf
    %26 = vmax.xlane.f32.xlu0 %v25
    %v27 = vpop.xlane.xlu0 %26
    %v28 = vsel %vm21, %v20, 0.0
    %29 = vadd.xlane.f32.xlu0 %v28
    %v30 = vpop.xlane.xlu0 %29
    %v31 = vmul.f32 %v30, 0.0625
    %vm32 = vcmask 7168
    %v33 = vsel %vm32, %v24, %v31
    %vm34 = vcmask 15360
    %v35 = vsel %vm34, %v33, %v27
    %vm36 = vcmask 23552
    %37 = vst.msk [vmem:[%s1] sm:$0xff] %vm36, %v35
    // Predicated region
    $region10: #{tpu_custom_call.1} parent=1 // pred_check
      _
    $region11: #{tpu_custom_call.1} parent=1 // pred_check_branch
      %39 = sbr.rel (0) target = $region13
    $region12: #{tpu_custom_call.1} parent=1 // pred_region
      _
    $region13: #{tpu_custom_call.1} parent=1 // pred_fallthru
      _
    // Predicated region
    $region14: #{tpu_custom_call.1} parent=1 // pred_check
      _
    $region15: #{tpu_custom_call.1} parent=1 // pred_check_branch
      %41 = sbr.rel (0) target = $region17
    $region16: #{tpu_custom_call.1} parent=1 // pred_region
      _
    $region17: #{tpu_custom_call.1} parent=1 // pred_fallthru
      _
    %42 = vsyncpa [#allocation3], 1

</llo_original>
